<compile_context>
chip_gen: v6e
topology: v6e:2x2x1
jax: 0.10.0
libtpu: 0.0.40
codegen_flags: <defaults>
</compile_context>

<pallas_src>
import functools

import jax
import jax.numpy as jnp
from jax.experimental import pallas as pl
from jax.experimental.pallas import tpu as pltpu

_NEG_BIG = -1.0e30          # bias for padded (fake) class columns
_MIB = 1024 * 1024


def _round_up(x, m):
    return ((x + m - 1) // m) * m


# -----------------------------------------------------------------------------
# Kernel: one batch tile x one K tile.
#   x_ref : [TB, TK]  bf16
#   w_ref : [TK, Cn]  bf16   (pre-transposed nn.Linear weight)
#   b_ref : [1,  Cn]  f32
#   o_ref : [TB, Cn]  f32    (same block across the K axis -> accumulator)
# Grid = (num_batch_tiles, num_k_tiles); K axis last, "arbitrary".
# -----------------------------------------------------------------------------
def _linear_logsoftmax_kernel(x_ref, w_ref, b_ref, o_ref):
    k = pl.program_id(1)

    @pl.when(k == 0)
    def _():
        o_ref[...] = jnp.zeros_like(o_ref)

    # bf16 x bf16 -> f32 accumulation on the MXU; canonical [TB,TK] @ [TK,Cn]
    # contraction (weight pre-transposed once at prep -> no per-step vxpose).
    o_ref[...] += jnp.dot(x_ref[...], w_ref[...],
                          preferred_element_type=jnp.float32)

    @pl.when(k == pl.num_programs(1) - 1)
    def _():
        logits = o_ref[...] + b_ref[...]
        m = jnp.max(logits, axis=1, keepdims=True)
        shifted = logits - m
        lse = jnp.log(jnp.sum(jnp.exp(shifted), axis=1, keepdims=True))
        o_ref[...] = shifted - lse


# -----------------------------------------------------------------------------
# Per-chip defaults (batch-tile preference + VMEM budget), queried once.
# -----------------------------------------------------------------------------
@functools.lru_cache(maxsize=None)
def _hw_defaults():
    kind = ""
    try:
        kind = jax.devices()[0].device_kind.lower()
    except Exception:
        pass
    vmem_cap = 128 * _MIB
    try:
        info = pltpu.get_tpu_info()
        vmem_cap = int(getattr(info, "vmem_capacity_bytes", vmem_cap))
    except Exception:
        pass

    if ("v5 lite" in kind) or ("v5e" in kind) or ("v5lite" in kind):
        tb_pref = 128                      # 4x128 MXU, single store slot
    elif vmem_cap <= 64 * _MIB:
        tb_pref = 256                      # v7x-class: 64 MiB VMEM per TC
    else:
        tb_pref = 512                      # v6e-class: 128 MiB VMEM headroom

    cap = 56 * _MIB if vmem_cap <= 64 * _MIB else 100 * _MIB
    budget = cap - 8 * _MIB                # headroom for Mosaic scratch
    return tb_pref, budget, cap


def _vmem_need_bytes(tb, tk, cn, nk):
    w_bufs = 1 if nk == 1 else 2           # weight single-buffered when resident
    return (2 * tb * tk * 2                # x tile, double-buffered, bf16
            + w_bufs * tk * cn * 2         # weight tile(s), bf16
            + 2 * tb * cn * 4              # output tile, double-buffered, f32
            + cn * 4)                      # bias, single-buffered


def _select_tiling(B, D, Cn, block_b, block_k):
    tb_pref, budget, cap = _hw_defaults()

    # ---- K (reduction-axis) tiling -----------------------------------------
    TK = D
    if block_k is not None and block_k < D:
        TK = block_k
    elif D * Cn * 2 + 4 * _MIB > budget:
        # Resident bf16 weight would blow the budget -> auto K-tile with a
        # divisor of D (keeps the last K block dense; no ragged reduction).
        for cand in (2048, 1024, 512, 256, 128):
            if cand < D and D % cand == 0:
                TK = cand
                break
    if D % TK != 0:                         # safety: never a ragged K block
        TK = D
    nk = D // TK

    # ---- batch tiling --------------------------------------------------------
    cands = [block_b] if block_b is not None else []
    cands += [t for t in (tb_pref, 512, 384, 256, 128, 64, 32, 16, 8)
              if t <= tb_pref]
    TB = 8
    for t in dict.fromkeys(cands):
        tb = B if B <= t else max(8, (t // 8) * 8)
        if _vmem_need_bytes(tb, TK, Cn, nk) <= budget:
            TB = tb
            break

    need = _vmem_need_bytes(TB, TK, Cn, nk)
    vmem_limit = int(min(max(need + 2 * _MIB, 16 * _MIB), cap))
    return TB, TK, nk, vmem_limit


def _block_spec(shape, index_map, buffers=None):
    """BlockSpec with optional buffer-count override (graceful fallback)."""
    if buffers is None:
        return pl.BlockSpec(shape, index_map)
    try:
        return pl.BlockSpec(shape, index_map, pipeline_mode=pl.Buffered(buffers))
    except TypeError:
        return pl.BlockSpec(shape, index_map)


# -----------------------------------------------------------------------------
# One-time parameter prep (hoisted out of the per-call hot path).
# -----------------------------------------------------------------------------
def prepare_params(weight, bias, *, block_k=None):
    """weight: [C, D] f32 (torch nn.Linear layout), bias: [C] f32.

    Returns (w_t, b2): w_t [Dp, Cn] bf16 pre-transposed (optionally class- and
    K-padded), b2 [1, Cn] f32 (padded classes get a large-negative bias so
    they drop out of the softmax).
    """
    C, D = weight.shape
    if C >= 128 and C % 128 != 0:
        # Lane-pad the class axis -> unmasked full-vreg stores.  For tiny C
        # (the real model's nclass=16) padding is skipped: a (TB, C) output
        # block equals the full last dim, and masked stores beat 8x HBM
        # write amplification.
        Cn = _round_up(C, 128)
        weight = jnp.pad(weight, ((0, Cn - C), (0, 0)))
        bias = jnp.pad(bias, (0, Cn - C), constant_values=_NEG_BIG)
    else:
        Cn = C
    if block_k is not None and D > block_k and D % block_k != 0:
        Dp = _round_up(D, block_k)
        weight = jnp.pad(weight, ((0, 0), (0, Dp - D)))
    w_t = jnp.transpose(weight).astype(jnp.bfloat16)      # [Dp, Cn]
    b2 = bias.astype(jnp.float32).reshape(1, Cn)
    return w_t, b2


# -----------------------------------------------------------------------------
# Jitted forward using prepared params.
# -----------------------------------------------------------------------------
@functools.partial(jax.jit, static_argnames=("nclass", "block_b", "block_k"))
def linear_logsoftmax_prepared(x, w_t, b2, *, nclass, block_b=None, block_k=None):
    """log_softmax(x @ W.T + b, axis=1) with pre-prepared (transposed/bf16) params."""
    B, D = x.shape
    Dp, Cn = w_t.shape

    TB, TK, nk, vmem_limit = _select_tiling(B, Dp, Cn, block_b, block_k)

    xb = x.astype(jnp.bfloat16)
    if Dp != D:                                       # K-padded weight -> pad x too
        xb = jnp.pad(xb, ((0, 0), (0, Dp - D)))

    n_btiles = -(-B // TB)
    grid = (n_btiles, nk)

    cost = pl.CostEstimate(
        flops=2 * B * Dp * Cn,
        bytes_accessed=(2 * B * Dp
                        + 2 * Dp * Cn * (n_btiles if nk > 1 else 1)
                        + 4 * B * Cn + 4 * Cn),
        transcendentals=B * Cn,
    )

    out = pl.pallas_call(
        _linear_logsoftmax_kernel,
        out_shape=jax.ShapeDtypeStruct((B, Cn), jnp.float32),
        grid_spec=pltpu.PrefetchScalarGridSpec(
            num_scalar_prefetch=0,
            grid=grid,
            in_specs=[
                # x: walks batch and K
                _block_spec((TB, TK), lambda i, k: (i, k)),
                # W^T: resident (single-buffered) when nk == 1, else walks K
                _block_spec((TK, Cn), lambda i, k: (k, 0),
                            buffers=(1 if nk == 1 else None)),
                # bias: grid-invariant -> single-buffered
                _block_spec((1, Cn), lambda i, k: (0, 0), buffers=1),
            ],
            out_specs=pl.BlockSpec((TB, Cn), lambda i, k: (i, 0)),
        ),
        compiler_params=pltpu.CompilerParams(
            dimension_semantics=("parallel", "arbitrary"),
            vmem_limit_bytes=vmem_limit,
        ),
        cost_estimate=cost,
    )(xb, w_t, b2)

    return out if Cn == nclass else out[:, :nclass]


def linear_logsoftmax(x, weight, bias, *, block_b=None, block_k=None):
    """LINEAR_LOGSOFTMAX forward from raw torch-layout params.

    Note: parameter prep (pad/transpose/bf16 cast) runs here on every call;
    in a real training loop cache prepare_params(...) at setup instead.
    """
    nclass = weight.shape[0]
    w_t, b2 = prepare_params(weight, bias, block_k=block_k)
    return linear_logsoftmax_prepared(x, w_t, b2, nclass=nclass,
                                      block_b=block_b, block_k=block_k)


# -----------------------------------------------------------------------------
# Pure-JAX reference (also the recommended tiny-problem XLA fallback).
# -----------------------------------------------------------------------------
def _reference(x, weight, bias, *, cast_bf16=True):
    if cast_bf16:
        x = x.astype(jnp.bfloat16).astype(jnp.float32)
        weight = weight.astype(jnp.bfloat16).astype(jnp.float32)
    logits = x @ weight.T + bias
    return jax.nn.log_softmax(logits, axis=1)


if __name__ == "__main__":
    key = jax.random.PRNGKey(0)

    def make_inputs(k, batch, input_dim, nclass):
        kx, kw, kb = jax.random.split(k, 3)
        bound = 1.0 / jnp.sqrt(jnp.float32(input_dim))
        x = jax.random.normal(kx, (batch, input_dim), dtype=jnp.float32)
        w = jax.random.uniform(kw, (nclass, input_dim),
                               minval=-bound, maxval=bound, dtype=jnp.float32)
        b = jax.random.uniform(kb, (nclass,),
                               minval=-bound, maxval=bound, dtype=jnp.float32)
        return x, w, b

    k1, k2 = jax.random.split(key)

    # --- Test 1: model-scale shapes (latent_size -> nclass), tiny-C path ----
    x1, w1, b1 = make_inputs(k1, batch=8, input_dim=64, nclass=16)
    wt1, bb1 = prepare_params(w1, b1)                 # hoisted parameter prep
    out1 = linear_logsoftmax_prepared(x1, wt1, bb1, nclass=16)
    out1 = jax.block_until_ready(out1)
    ref1 = _reference(x1, w1, b1)
    assert out1.shape == (8, 16)
    assert bool(jnp.all(jnp.isfinite(out1)))
    assert jnp.allclose(out1, ref1, atol=2e-3, rtol=2e-3), "mismatch (test 1)"

    # --- Test 2: exercise K-tiling + lane-padded class axis + multi-tile B --
    x2, w2, b2 = make_inputs(k2, batch=256, input_dim=512, nclass=200)
    out2 = linear_logsoftmax(x2, w2, b2, block_b=128, block_k=128)
    out2 = jax.block_until_ready(out2)
    ref2 = _reference(x2, w2, b2)
    assert out2.shape == (256, 200)
    assert bool(jnp.all(jnp.isfinite(out2)))
    assert jnp.allclose(out2, ref2, atol=2e-3, rtol=2e-3), "mismatch (test 2)"

    print("KERNEL_OK")
</pallas_src>

<mosaic_0001>
module attributes {stable_mosaic.version = 11 : i64} {
  func.func @_linear_logsoftmax_kernel(%arg0: i32, %arg1: i32, %arg2: memref<8x64xbf16, #tpu.memory_space<vmem>>, %arg3: memref<64x16xbf16, #tpu.memory_space<vmem>>, %arg4: memref<1x16xf32, #tpu.memory_space<vmem>>, %arg5: memref<8x16xf32, #tpu.memory_space<vmem>>) attributes {dimension_semantics = [#tpu.dimension_semantics<parallel>, #tpu.dimension_semantics<arbitrary>], iteration_bounds = array<i64: 1, 1>, scalar_prefetch = 0 : i64, scratch_operands = 0 : i64, tpu.core_type = #tpu.core_type<tc>, window_params = [{transform_indices = @transform_0, window_bounds = array<i64: 8, 64>}, {pipeline_mode = #tpu.pipeline_mode<synchronous>, transform_indices = @transform_1, window_bounds = array<i64: 64, 16>}, {pipeline_mode = #tpu.pipeline_mode<synchronous>, transform_indices = @transform_2, window_bounds = array<i64: 1, 16>}, {transform_indices = @transform_3, window_bounds = array<i64: 8, 16>}]} {
    %c0_i32 = arith.constant 0 : i32
    %0 = arith.cmpi eq, %arg1, %c0_i32 : i32
    %1 = arith.extui %0 : i1 to i32
    %c0_i32_0 = arith.constant 0 : i32
    %2 = arith.cmpi ne, %1, %c0_i32_0 : i32
    scf.if %2 {
      %cst_10 = arith.constant 0.000000e+00 : f32
      %12 = vector.broadcast %cst_10 : f32 to vector<8x16xf32>
      %c0_11 = arith.constant 0 : index
      %c0_12 = arith.constant 0 : index
      %13 = vector.load %arg5[%c0_11, %c0_12] : memref<8x16xf32, #tpu.memory_space<vmem>>, vector<8x16xf32>
      tpu.vector_store %arg5[%c0_11, %c0_12], %12 {strides = array<i32>} : memref<8x16xf32, #tpu.memory_space<vmem>>, vector<8x16xf32>,
    } else {
    }
    %c0 = arith.constant 0 : index
    %c0_1 = arith.constant 0 : index
    %3 = vector.load %arg5[%c0, %c0_1] : memref<8x16xf32, #tpu.memory_space<vmem>>, vector<8x16xf32>
    %c0_2 = arith.constant 0 : index
    %c0_3 = arith.constant 0 : index
    %4 = vector.load %arg2[%c0_2, %c0_3] : memref<8x64xbf16, #tpu.memory_space<vmem>>, vector<8x64xbf16>
    %c0_4 = arith.constant 0 : index
    %c0_5 = arith.constant 0 : index
    %5 = vector.load %arg3[%c0_4, %c0_5] : memref<64x16xbf16, #tpu.memory_space<vmem>>, vector<64x16xbf16>
    %cst = arith.constant dense<0.000000e+00> : vector<8x16xf32>
    %6 = tpu.matmul %4, %5, %cst {dimension_numbers = #tpu.dot_dimension_numbers<[1], [0], [0], [1], [0, 0, 1, 1], [], []>} : vector<8x64xbf16>, vector<64x16xbf16>, vector<8x16xf32> -> vector<8x16xf32>
    %7 = arith.addf %3, %6 : vector<8x16xf32>
    %c0_6 = arith.constant 0 : index
    %c0_7 = arith.constant 0 : index
    %8 = vector.load %arg5[%c0_6, %c0_7] : memref<8x16xf32, #tpu.memory_space<vmem>>, vector<8x16xf32>
    tpu.vector_store %arg5[%c0_6, %c0_7], %7 {strides = array<i32>} : memref<8x16xf32, #tpu.memory_space<vmem>>, vector<8x16xf32>,
    %c0_i32_8 = arith.constant 0 : i32
    %9 = arith.cmpi eq, %arg1, %c0_i32_8 : i32
    %10 = arith.extui %9 : i1 to i32
    %c0_i32_9 = arith.constant 0 : i32
    %11 = arith.cmpi ne, %10, %c0_i32_9 : i32
    scf.if %11 {
      %c0_10 = arith.constant 0 : index
      %c0_11 = arith.constant 0 : index
      %12 = vector.load %arg5[%c0_10, %c0_11] : memref<8x16xf32, #tpu.memory_space<vmem>>, vector<8x16xf32>
      %c0_12 = arith.constant 0 : index
      %c0_13 = arith.constant 0 : index
      %13 = vector.load %arg4[%c0_12, %c0_13] : memref<1x16xf32, #tpu.memory_space<vmem>>, vector<1x16xf32>
      %14 = vector.broadcast %13 : vector<1x16xf32> to vector<8x16xf32>
      %15 = arith.addf %12, %14 : vector<8x16xf32>
      %cst_14 = arith.constant dense<0xFF800000> : vector<8xf32>
      %16 = vector.multi_reduction <maximumf>, %15, %cst_14 [1] : vector<8x16xf32> to vector<8xf32>
      %17 = vector.shape_cast %16 : vector<8xf32> to vector<8x1xf32>
      %18 = vector.broadcast %17 : vector<8x1xf32> to vector<8x16xf32>
      %19 = arith.subf %15, %18 : vector<8x16xf32>
      %20 = math.exp %19 : vector<8x16xf32>
      %cst_15 = arith.constant dense<0.000000e+00> : vector<8xf32>
      %21 = vector.multi_reduction <add>, %20, %cst_15 [1] : vector<8x16xf32> to vector<8xf32>
      %22 = vector.shape_cast %21 : vector<8xf32> to vector<8x1xf32>
      %23 = math.log %22 : vector<8x1xf32>
      %24 = vector.broadcast %23 : vector<8x1xf32> to vector<8x16xf32>
      %25 = arith.subf %19, %24 : vector<8x16xf32>
      %c0_16 = arith.constant 0 : index
      %c0_17 = arith.constant 0 : index
      %26 = vector.load %arg5[%c0_16, %c0_17] : memref<8x16xf32, #tpu.memory_space<vmem>>, vector<8x16xf32>
      tpu.vector_store %arg5[%c0_16, %c0_17], %25 {strides = array<i32>} : memref<8x16xf32, #tpu.memory_space<vmem>>, vector<8x16xf32>,
    } else {
    }
    return
  }
  func.func @transform_0(%arg0: i32, %arg1: i32) -> (i32, i32) {
    %c0_i32 = arith.constant 0 : i32
    return %arg0, %arg1 : i32, i32
  }
  func.func @transform_1(%arg0: i32, %arg1: i32) -> (i32, i32) {
    %c0_i32 = arith.constant 0 : i32
    %c0_i32_0 = arith.constant 0 : i32
    return %arg1, %c0_i32 : i32, i32
  }
  func.func @transform_2(%arg0: i32, %arg1: i32) -> (i32, i32) {
    %c0_i32 = arith.constant 0 : i32
    %c0_i32_0 = arith.constant 0 : i32
    %c0_i32_1 = arith.constant 0 : i32
    return %c0_i32, %c0_i32_0 : i32, i32
  }
  func.func @transform_3(%arg0: i32, %arg1: i32) -> (i32, i32) {
    %c0_i32 = arith.constant 0 : i32
    %c0_i32_0 = arith.constant 0 : i32
    return %arg0, %c0_i32 : i32, i32
  }
}

</mosaic_0001>

<llo_original>
// kernel: linear_logsoftmax_prepared.1
$region0: #{linear_logsoftmax_prepared.1}
  #allocation0 [shape = 'u32[]', space=smem, size = 0x4, offset = 0x4, fixed_abs, tag = 'smem constant byte address 0x4 - core index']
  #allocation1 [shape = 'u32[144,128]{1,0:T(1,128)}', space=vmem, size = 0x12000, scoped, tag = 'internal scratch']
  %s0 = inlined_call_operand.vmem [shape: bf16[8,64], index: 0, kind: input, shape index: {}]
  %s1 = inlined_call_operand.vmem [shape: bf16[64,16], index: 1, kind: input, shape index: {}]
  %s2 = inlined_call_operand.vmem [shape: f32[1,16], index: 2, kind: input, shape index: {}]
  %s3 = inlined_call_operand.hbm [shape: f32[8,16], index: 3, kind: output, shape index: {}]
  %s4 = sld [smem:[#allocation0]]
  $region30: #{linear_logsoftmax_prepared.1} parent=0
    _
  %s6 = ssub.s32 1, %s4
  %s7 = scalar_select 0, %s6, %s4
  $region1: #{linear_logsoftmax_prepared.1} parent=0
    #allocation2 [shape = 'u8[4096]{0}', space=vmem, size = 0x1000, scoped, tag = 'output window, operand 0, single buffered']
    #allocation3 [shape = 's32[1]{0}', space=sflag, size = 0x4, scoped, tag = 'scoped memory for linear_logsoftmax_prepared.1']
    %8 = vsyncpa [#allocation3], 0
    // Predicated region
    $region2: #{linear_logsoftmax_prepared.1} parent=1 // pred_check
      _
    $region3: #{linear_logsoftmax_prepared.1} parent=1 // pred_check_branch
      %10 = sbr.rel (0) target = $region5
    $region4: #{linear_logsoftmax_prepared.1} parent=1 // pred_region
      _
    $region5: #{linear_logsoftmax_prepared.1} parent=1 // pred_fallthru
      _
    // Predicated region
    $region6: #{linear_logsoftmax_prepared.1} parent=1 // pred_check
      _
    $region7: #{linear_logsoftmax_prepared.1} parent=1 // pred_check_branch
      %12 = sbr.rel (0) target = $region9
    $region8: #{linear_logsoftmax_prepared.1} parent=1 // pred_region
      _
    $region9: #{linear_logsoftmax_prepared.1} parent=1 // pred_fallthru
      _
    // Predicated region
    $region10: #{linear_logsoftmax_prepared.1} parent=1 // pred_check
      _
    $region11: #{linear_logsoftmax_prepared.1} parent=1 // pred_check_branch
      %14 = sbr.rel (0) target = $region13
    $region12: #{linear_logsoftmax_prepared.1} parent=1 // pred_region
      _
    $region13: #{linear_logsoftmax_prepared.1} parent=1 // pred_fallthru
      _
    %p16 = scmp.eq.s32.totalorder 0, 0
    // Predicated region
    $region14: #{linear_logsoftmax_prepared.1} parent=1 // pred_check
      %p17 = pneg %p16
    $region15: #{linear_logsoftmax_prepared.1} parent=1 // pred_check_branch
      %19 = sbr.rel (%p17) target = $region17
    $region16: #{linear_logsoftmax_prepared.1} parent=1 // pred_region
      %vm20 = vcmask 130048
      %21 = vst.msk [vmem:[#allocation2] sm:$0xff] %vm20, 0.0
    $region17: #{linear_logsoftmax_prepared.1} parent=1 // pred_fallthru
      _
    %v22 = vld [vmem:[#allocation2] sm:$0xff]
    %v23 = vld [vmem:[%s0] sm:$0xf]
    %v24 = vld [vmem:[%s1] sm:$0xf]
    %v25 = vld [vmem:[%s1 + $0x4] sm:$0xf]
    %v26 = vld [vmem:[%s1 + $0x8] sm:$0xf]
    %v27 = vld [vmem:[%s1 + $0xc] sm:$0xf]
    %v28 = vld [vmem:[%s1 + $0x10] sm:$0xf]
    %v29 = vld [vmem:[%s1 + $0x14] sm:$0xf]
    %v30 = vld [vmem:[%s1 + $0x18] sm:$0xf]
    %v31 = vld [vmem:[%s1 + $0x1c] sm:$0xf]
    %v40 = vunpack.c.l.b16 %v24
    %v41 = vunpack.c.l.b16 %v25
    %v42 = vunpack.c.l.b16 %v26
    %v43 = vunpack.c.l.b16 %v27
    %v44 = vunpack.c.l.b16 %v28
    %v45 = vunpack.c.l.b16 %v29
    %v46 = vunpack.c.l.b16 %v30
    %v47 = vunpack.c.l.b16 %v31
    %v48 = vpack.c.b16 %v41, %v40
    %v49 = vpack.c.b16 %v43, %v42
    %v50 = vpack.c.b16 %v45, %v44
    %v51 = vpack.c.b16 %v47, %v46
    %vm56 = vcmask 523264
    %v58 = vsel %vm56, %v23, 0
    %60 = vmatprep.subr.bf16.mxu0 0
    %61 = vmatpush1.bf16.msra.mxu0 0
    %62 = vmatprep.subr.bf16.mxu0 0
    %63 = vmatpush1.bf16.msra.mxu0 0
    %64 = vmatprep.subr.bf16.mxu0 0
    %65 = vmatpush1.bf16.msra.mxu0 0
    %66 = vmatprep.subr.bf16.mxu0 0
    %67 = vmatpush1.bf16.msra.mxu0 0
    %68 = vmatprep.subr.bf16.mxu0 0
    %69 = vmatpush1.bf16.msra.mxu0 %v51
    %70 = vmatprep.subr.bf16.mxu0 0
    %71 = vmatpush1.bf16.msra.mxu0 %v50
    %72 = vmatprep.subr.bf16.mxu0 0
    %73 = vmatpush1.bf16.msra.mxu0 %v49
    %74 = vmatprep.subr.bf16.mxu0 0
    %75 = vmatpush1.bf16.msra.mxu0 %v48
    %76 = vmatprep.subr.bf16.mxu0 0
    %77 = vmatpush2.bf16.msra.mxu0 0
    %78 = vmatprep.subr.bf16.mxu0 0
    %79 = vmatpush2.bf16.msra.mxu0 0
    %80 = vmatprep.subr.bf16.mxu0 0
    %81 = vmatpush2.bf16.msra.mxu0 0
    %82 = vmatprep.subr.bf16.mxu0 0
    %83 = vmatpush2.bf16.msra.mxu0 0
    %84 = vmatprep.subr.bf16.mxu0 0
    %85 = vmatpush2.bf16.msra.mxu0 0
    %86 = vmatprep.subr.bf16.mxu0 0
    %87 = vmatpush2.bf16.msra.mxu0 0
    %88 = vmatprep.subr.bf16.mxu0 0
    %89 = vmatpush2.bf16.msra.mxu0 0
    %90 = vmatprep.subr.bf16.mxu0 0
    %91 = vmatpush2.bf16.msra.mxu0 0
    %92 = vmatprep.mubr.bf16.mxu0 0
    %93 = vmatmul.mubr.bf16.gmra.mxu0 %v58
    %v94 = vpop.f32.mrf.mxu0
    %v95 = vadd.f32 0.0, %v94
    %v96 = vpop.f32.mrf.mxu0
    %v97 = vpop.f32.mrf.mxu0
    %v98 = vpop.f32.mrf.mxu0
    %99 = vdwg.mxu0
    %v100 = vadd.f32 %v22, %v95
    %vm101 = vcmask 130048
    %102 = vst.msk [vmem:[#allocation2] sm:$0xff] %vm101, %v100
    // Predicated region
    $region18: #{linear_logsoftmax_prepared.1} parent=1 // pred_check
      %p103 = pneg %p16
    $region19: #{linear_logsoftmax_prepared.1} parent=1 // pred_check_branch
      %105 = sbr.rel (%p103) target = $region21
    $region20: #{linear_logsoftmax_prepared.1} parent=1 // pred_region
      %v106 = vld [vmem:[#allocation2] sm:$0xff]
      %v107 = vld [vmem:[%s2] sm:$0x1]
      %v109 = vlaneseq
      %v110 = vshrl.u32 %v109, 7
      %v111 = vsub.s32 0, %v110
      %v112 = vrot.slane %v107, %v111
      %v114 = vadd.f32 %v106, %v112
      %v115 = vsel %vm101, %v114, -inf
      %116 = vmax.xlane.f32.xlu0 %v115
      %v117 = vpop.xlane.xlu0 %116
      %v118 = vsub.f32 %v114, %v117
      %v119 = vmul.f32 %v118, 1.442695
      %v120 = vpow.pop %v119
      %v121 = vsel %vm101, %v120, 0.0
      %122 = vadd.xlane.f32.xlu0 %v121
      %v123 = vpop.xlane.xlu0 %122
      %v124 = vlog2.pop %v123
      %v125 = vmul.f32 %v124, 0.6931472
      %v126 = vsub.f32 %v118, %v125
      %127 = vst.msk [vmem:[#allocation2] sm:$0xff] %vm101, %v126
    $region21: #{linear_logsoftmax_prepared.1} parent=1 // pred_fallthru
      _
    // Predicated region
    $region22: #{linear_logsoftmax_prepared.1} parent=1 // pred_check
      _
    $region23: #{linear_logsoftmax_prepared.1} parent=1 // pred_check_branch
      %129 = sbr.rel (0) target = $region25
    $region24: #{linear_logsoftmax_prepared.1} parent=1 // pred_region
      %s131 = ssub.s32 128, 128
      %132 = vsyncadd [#allocation3], %s131
      %s134 = sshll.u32 [#allocation2], 4
      %s135 = int_to_ptr.vmem [resolvable:$true] %s134
      %137 = dma.vmem_to_hbm [thread:$0]  %s135, 128, %s3, [#allocation3]
    $region25: #{linear_logsoftmax_prepared.1} parent=1 // pred_fallthru
      _
    // Predicated region
    $region26: #{linear_logsoftmax_prepared.1} parent=1 // pred_check
      _
    $region27: #{linear_logsoftmax_prepared.1} parent=1 // pred_check_branch
      %139 = sbr.rel (0) target = $region29
    $region28: #{linear_logsoftmax_prepared.1} parent=1 // pred_region
      %140 = dma.done [#allocation3], 128
    $region29: #{linear_logsoftmax_prepared.1} parent=1 // pred_fallthru
      _
    %141 = vsyncpa [#allocation3], 1

</llo_original>
